<compile_context>
chip_gen: v6e
topology: v6e:2x2x1
jax: 0.10.0
libtpu: 0.0.40
codegen_flags: <defaults>
</compile_context>

<pallas_src>
import jax
import jax.numpy as jnp
from jax.experimental import pallas as pl
from jax.experimental.pallas import tpu as pltpu

NEG_SLOPE = 0.01   # F.leaky_relu default
LANE = 128         # padded action width -> lane-dense output stores
NEG_INF = -1e30    # bias value for padded logit lanes (exp -> 0)


def _leaky_relu(x):
    return jnp.where(x > 0, x, NEG_SLOPE * x)


def dqn_kernel(x_ref,
               w1_ref, b1_ref,
               w2_ref, b2_ref,
               w3_ref, b3_ref,
               w4_ref, b4_ref,
               out_ref):
    x = x_ref[...]  # (tile_b, state_size) bf16

    # fc1 + leaky_relu   (bf16 operands, f32 accumulate)
    h = jnp.dot(x, w1_ref[...], preferred_element_type=jnp.float32) + b1_ref[...]
    h = _leaky_relu(h).astype(jnp.bfloat16)

    # fc2 + leaky_relu
    h = jnp.dot(h, w2_ref[...], preferred_element_type=jnp.float32) + b2_ref[...]
    h = _leaky_relu(h).astype(jnp.bfloat16)

    # fc3 + leaky_relu
    h = jnp.dot(h, w3_ref[...], preferred_element_type=jnp.float32) + b3_ref[...]
    h = _leaky_relu(h).astype(jnp.bfloat16)

    # logits layer is pre-padded to LANE wide; padded lanes carry a -1e30 bias
    # so they contribute exp(..)==0 to the softmax (keeps the store lane-dense).
    logits = jnp.dot(h, w4_ref[...], preferred_element_type=jnp.float32) + b4_ref[...]

    # numerically stable softmax over the (padded) action dim, f32
    m = jnp.max(logits, axis=-1, keepdims=True)
    e = jnp.exp(logits - m)
    denom = jnp.sum(e, axis=-1, keepdims=True)
    out_ref[...] = (e * pl.reciprocal(denom, approx=True)).astype(out_ref.dtype)


def _round_up(x, m):
    return (x + m - 1) // m * m


@jax.jit
def dqn_forward(state, w1, b1, w2, b2, w3, b3, w4, b4):
    batch, state_size = state.shape
    action_size = w4.shape[1]

    # ---- pad logits layer to a lane-dense (128-wide) output ----
    w4p = jnp.zeros((w4.shape[0], LANE), jnp.float32).at[:, :action_size].set(w4)
    b4p = jnp.full((1, LANE), NEG_INF, jnp.float32).at[:, :action_size].set(b4)

    # ---- bf16 matmul operands (f32 accumulation inside the kernel) ----
    xs = state.astype(jnp.bfloat16)
    w1b, w2b, w3b, w4b = (w.astype(jnp.bfloat16) for w in (w1, w2, w3, w4p))
    b1f, b2f, b3f, b4f = (b.astype(jnp.float32) for b in (b1, b2, b3, b4p))

    # ---- batch tiling: tall MXU LHS, pipelined/parallel over the grid ----
    tile_b = min(256, _round_up(batch, 16))   # multiple of 16 (bf16 sublanes)
    b_pad = _round_up(batch, tile_b)
    if b_pad != batch:
        xs = jnp.pad(xs, ((0, b_pad - batch), (0, 0)))
    grid = (b_pad // tile_b,)

    # weights/biases: full-array blocks, constant index -> stay VMEM-resident
    resident = lambda a: pl.BlockSpec(a.shape, lambda i: (0,) * a.ndim)

    flops = 2 * b_pad * (state_size * 128 + 128 * 128 + 128 * 64 + 64 * LANE)
    bytes_accessed = (
        xs.size * 2
        + sum(w.size * 2 for w in (w1b, w2b, w3b, w4b))
        + sum(b.size * 4 for b in (b1f, b2f, b3f, b4f))
        + b_pad * LANE * 4)

    out = pl.pallas_call(
        dqn_kernel,
        out_shape=jax.ShapeDtypeStruct((b_pad, LANE), jnp.float32),
        grid=grid,
        in_specs=[
            pl.BlockSpec((tile_b, state_size), lambda i: (i, 0)),
            resident(w1b), resident(b1f),
            resident(w2b), resident(b2f),
            resident(w3b), resident(b3f),
            resident(w4b), resident(b4f),
        ],
        out_specs=pl.BlockSpec((tile_b, LANE), lambda i: (i, 0)),
        compiler_params=pltpu.CompilerParams(
            dimension_semantics=("parallel",)),
        cost_estimate=pl.CostEstimate(
            flops=flops,
            transcendentals=b_pad * LANE,
            bytes_accessed=bytes_accessed),
    )(xs, w1b, b1f, w2b, b2f, w3b, b3f, w4b, b4f)

    # drop batch padding and the padded action lanes
    return out[:batch, :action_size]


def init_params(key, state_size, action_size):
    """Deterministic init mimicking nn.Linear (uniform +/- 1/sqrt(fan_in)).

    Weights are stored as (in_features, out_features)."""
    dims = [(state_size, 128), (128, 128), (128, 64), (64, action_size)]
    params = []
    for fan_in, fan_out in dims:
        key, kw, kb = jax.random.split(key, 3)
        bound = 1.0 / (fan_in ** 0.5)
        w = jax.random.uniform(kw, (fan_in, fan_out), jnp.float32, -bound, bound)
        b = jax.random.uniform(kb, (1, fan_out), jnp.float32, -bound, bound)
        params.append((w, b))
    return params


def dqn_forward_ref(state, params):
    """Pure-JAX f32 reference for correctness check."""
    h = state
    for i, (w, b) in enumerate(params):
        h = h @ w + b
        if i < 3:
            h = _leaky_relu(h)
    return jax.nn.softmax(h, axis=-1)


if __name__ == "__main__":
    batch = 8
    state_size = 32
    action_size = 10

    key = jax.random.PRNGKey(0)
    key, kx = jax.random.split(key)
    state = jax.random.normal(kx, (batch, state_size), jnp.float32)

    params = init_params(key, state_size, action_size)
    flat = [t for pair in params for t in pair]

    out = jax.block_until_ready(dqn_forward(state, *flat))
    ref = dqn_forward_ref(state, params)

    assert out.shape == (batch, action_size)
    # bf16 operands + approx reciprocal vs f32 reference -> loose tolerance
    assert jnp.allclose(out, ref, atol=2e-2, rtol=2e-2), "mismatch vs reference"
    # softmax rows sum to ~1 (approx reciprocal)
    assert jnp.allclose(jnp.sum(out, axis=-1), 1.0, atol=1e-2)

    print("KERNEL_OK")
</pallas_src>

<mosaic_0001>
module attributes {stable_mosaic.version = 11 : i64} {
  func.func @dqn_kernel(%arg0: i32, %arg1: memref<16x32xbf16, #tpu.memory_space<vmem>>, %arg2: memref<32x128xbf16, #tpu.memory_space<vmem>>, %arg3: memref<1x128xf32, #tpu.memory_space<vmem>>, %arg4: memref<128x128xbf16, #tpu.memory_space<vmem>>, %arg5: memref<1x128xf32, #tpu.memory_space<vmem>>, %arg6: memref<128x64xbf16, #tpu.memory_space<vmem>>, %arg7: memref<1x64xf32, #tpu.memory_space<vmem>>, %arg8: memref<64x128xbf16, #tpu.memory_space<vmem>>, %arg9: memref<1x128xf32, #tpu.memory_space<vmem>>, %arg10: memref<16x128xf32, #tpu.memory_space<vmem>>) attributes {dimension_semantics = [#tpu.dimension_semantics<parallel>], iteration_bounds = array<i64: 1>, scalar_prefetch = 0 : i64, scratch_operands = 0 : i64, tpu.core_type = #tpu.core_type<tc>, window_params = [{transform_indices = @transform_0, window_bounds = array<i64: 16, 32>}, {pipeline_mode = #tpu.pipeline_mode<synchronous>, transform_indices = @transform_1, window_bounds = array<i64: 32, 128>}, {pipeline_mode = #tpu.pipeline_mode<synchronous>, transform_indices = @transform_2, window_bounds = array<i64: 1, 128>}, {pipeline_mode = #tpu.pipeline_mode<synchronous>, transform_indices = @transform_3, window_bounds = array<i64: 128, 128>}, {pipeline_mode = #tpu.pipeline_mode<synchronous>, transform_indices = @transform_4, window_bounds = array<i64: 1, 128>}, {pipeline_mode = #tpu.pipeline_mode<synchronous>, transform_indices = @transform_5, window_bounds = array<i64: 128, 64>}, {pipeline_mode = #tpu.pipeline_mode<synchronous>, transform_indices = @transform_6, window_bounds = array<i64: 1, 64>}, {pipeline_mode = #tpu.pipeline_mode<synchronous>, transform_indices = @transform_7, window_bounds = array<i64: 64, 128>}, {pipeline_mode = #tpu.pipeline_mode<synchronous>, transform_indices = @transform_8, window_bounds = array<i64: 1, 128>}, {transform_indices = @transform_9, window_bounds = array<i64: 16, 128>}]} {
    %c0 = arith.constant 0 : index
    %c0_0 = arith.constant 0 : index
    %0 = vector.load %arg1[%c0, %c0_0] : memref<16x32xbf16, #tpu.memory_space<vmem>>, vector<16x32xbf16>
    %c0_1 = arith.constant 0 : index
    %c0_2 = arith.constant 0 : index
    %1 = vector.load %arg2[%c0_1, %c0_2] : memref<32x128xbf16, #tpu.memory_space<vmem>>, vector<32x128xbf16>
    %cst = arith.constant dense<0.000000e+00> : vector<16x128xf32>
    %2 = tpu.matmul %0, %1, %cst {dimension_numbers = #tpu.dot_dimension_numbers<[1], [0], [0], [1], [0, 0, 1, 1], [], []>} : vector<16x32xbf16>, vector<32x128xbf16>, vector<16x128xf32> -> vector<16x128xf32>
    %c0_3 = arith.constant 0 : index
    %c0_4 = arith.constant 0 : index
    %3 = vector.load %arg3[%c0_3, %c0_4] : memref<1x128xf32, #tpu.memory_space<vmem>>, vector<1x128xf32>
    %4 = vector.broadcast %3 : vector<1x128xf32> to vector<16x128xf32>
    %5 = arith.addf %2, %4 : vector<16x128xf32>
    %cst_5 = arith.constant 0.000000e+00 : f32
    %6 = vector.broadcast %cst_5 : f32 to vector<16x128xf32>
    %7 = arith.cmpf ogt, %5, %6 : vector<16x128xf32>
    %cst_6 = arith.constant 0.00999999977 : f32
    %8 = vector.broadcast %cst_6 : f32 to vector<16x128xf32>
    %9 = arith.mulf %8, %5 : vector<16x128xf32>
    %10 = arith.select %7, %5, %9 : vector<16x128xi1>, vector<16x128xf32>
    %11 = arith.truncf %10 : vector<16x128xf32> to vector<16x128xbf16>
    %c0_7 = arith.constant 0 : index
    %c0_8 = arith.constant 0 : index
    %12 = vector.load %arg4[%c0_7, %c0_8] : memref<128x128xbf16, #tpu.memory_space<vmem>>, vector<128x128xbf16>
    %cst_9 = arith.constant dense<0.000000e+00> : vector<16x128xf32>
    %13 = tpu.matmul %11, %12, %cst_9 {dimension_numbers = #tpu.dot_dimension_numbers<[1], [0], [0], [1], [0, 0, 1, 1], [], []>} : vector<16x128xbf16>, vector<128x128xbf16>, vector<16x128xf32> -> vector<16x128xf32>
    %c0_10 = arith.constant 0 : index
    %c0_11 = arith.constant 0 : index
    %14 = vector.load %arg5[%c0_10, %c0_11] : memref<1x128xf32, #tpu.memory_space<vmem>>, vector<1x128xf32>
    %15 = vector.broadcast %14 : vector<1x128xf32> to vector<16x128xf32>
    %16 = arith.addf %13, %15 : vector<16x128xf32>
    %cst_12 = arith.constant 0.000000e+00 : f32
    %17 = vector.broadcast %cst_12 : f32 to vector<16x128xf32>
    %18 = arith.cmpf ogt, %16, %17 : vector<16x128xf32>
    %cst_13 = arith.constant 0.00999999977 : f32
    %19 = vector.broadcast %cst_13 : f32 to vector<16x128xf32>
    %20 = arith.mulf %19, %16 : vector<16x128xf32>
    %21 = arith.select %18, %16, %20 : vector<16x128xi1>, vector<16x128xf32>
    %22 = arith.truncf %21 : vector<16x128xf32> to vector<16x128xbf16>
    %c0_14 = arith.constant 0 : index
    %c0_15 = arith.constant 0 : index
    %23 = vector.load %arg6[%c0_14, %c0_15] : memref<128x64xbf16, #tpu.memory_space<vmem>>, vector<128x64xbf16>
    %cst_16 = arith.constant dense<0.000000e+00> : vector<16x64xf32>
    %24 = tpu.matmul %22, %23, %cst_16 {dimension_numbers = #tpu.dot_dimension_numbers<[1], [0], [0], [1], [0, 0, 1, 1], [], []>} : vector<16x128xbf16>, vector<128x64xbf16>, vector<16x64xf32> -> vector<16x64xf32>
    %c0_17 = arith.constant 0 : index
    %c0_18 = arith.constant 0 : index
    %25 = vector.load %arg7[%c0_17, %c0_18] : memref<1x64xf32, #tpu.memory_space<vmem>>, vector<1x64xf32>
    %26 = vector.broadcast %25 : vector<1x64xf32> to vector<16x64xf32>
    %27 = arith.addf %24, %26 : vector<16x64xf32>
    %cst_19 = arith.constant 0.000000e+00 : f32
    %28 = vector.broadcast %cst_19 : f32 to vector<16x64xf32>
    %29 = arith.cmpf ogt, %27, %28 : vector<16x64xf32>
    %cst_20 = arith.constant 0.00999999977 : f32
    %30 = vector.broadcast %cst_20 : f32 to vector<16x64xf32>
    %31 = arith.mulf %30, %27 : vector<16x64xf32>
    %32 = arith.select %29, %27, %31 : vector<16x64xi1>, vector<16x64xf32>
    %33 = arith.truncf %32 : vector<16x64xf32> to vector<16x64xbf16>
    %c0_21 = arith.constant 0 : index
    %c0_22 = arith.constant 0 : index
    %34 = vector.load %arg8[%c0_21, %c0_22] : memref<64x128xbf16, #tpu.memory_space<vmem>>, vector<64x128xbf16>
    %cst_23 = arith.constant dense<0.000000e+00> : vector<16x128xf32>
    %35 = tpu.matmul %33, %34, %cst_23 {dimension_numbers = #tpu.dot_dimension_numbers<[1], [0], [0], [1], [0, 0, 1, 1], [], []>} : vector<16x64xbf16>, vector<64x128xbf16>, vector<16x128xf32> -> vector<16x128xf32>
    %c0_24 = arith.constant 0 : index
    %c0_25 = arith.constant 0 : index
    %36 = vector.load %arg9[%c0_24, %c0_25] : memref<1x128xf32, #tpu.memory_space<vmem>>, vector<1x128xf32>
    %37 = vector.broadcast %36 : vector<1x128xf32> to vector<16x128xf32>
    %38 = arith.addf %35, %37 : vector<16x128xf32>
    %cst_26 = arith.constant dense<0xFF800000> : vector<16xf32>
    %39 = vector.multi_reduction <maximumf>, %38, %cst_26 [1] : vector<16x128xf32> to vector<16xf32>
    %40 = vector.shape_cast %39 : vector<16xf32> to vector<16x1xf32>
    %41 = vector.broadcast %40 : vector<16x1xf32> to vector<16x128xf32>
    %42 = arith.subf %38, %41 : vector<16x128xf32>
    %43 = math.exp %42 : vector<16x128xf32>
    %cst_27 = arith.constant dense<0.000000e+00> : vector<16xf32>
    %44 = vector.multi_reduction <add>, %43, %cst_27 [1] : vector<16x128xf32> to vector<16xf32>
    %45 = vector.shape_cast %44 : vector<16xf32> to vector<16x1xf32>
    %46 = tpu.reciprocal %45 {approx = true} : vector<16x1xf32> -> vector<16x1xf32>
    %47 = vector.broadcast %46 : vector<16x1xf32> to vector<16x128xf32>
    %48 = arith.mulf %43, %47 : vector<16x128xf32>
    %c0_28 = arith.constant 0 : index
    %c0_29 = arith.constant 0 : index
    %49 = vector.load %arg10[%c0_28, %c0_29] : memref<16x128xf32, #tpu.memory_space<vmem>>, vector<16x128xf32>
    tpu.vector_store %arg10[%c0_28, %c0_29], %48 {strides = array<i32>} : memref<16x128xf32, #tpu.memory_space<vmem>>, vector<16x128xf32>,
    return
  }
  func.func @transform_0(%arg0: i32) -> (i32, i32) {
    %c0_i32 = arith.constant 0 : i32
    %c0_i32_0 = arith.constant 0 : i32
    return %arg0, %c0_i32 : i32, i32
  }
  func.func @transform_1(%arg0: i32) -> (i32, i32) {
    %c0_i32 = arith.constant 0 : i32
    %c0_i32_0 = arith.constant 0 : i32
    %c0_i32_1 = arith.constant 0 : i32
    return %c0_i32, %c0_i32_0 : i32, i32
  }
  func.func @transform_2(%arg0: i32) -> (i32, i32) {
    %c0_i32 = arith.constant 0 : i32
    %c0_i32_0 = arith.constant 0 : i32
    %c0_i32_1 = arith.constant 0 : i32
    return %c0_i32, %c0_i32_0 : i32, i32
  }
  func.func @transform_3(%arg0: i32) -> (i32, i32) {
    %c0_i32 = arith.constant 0 : i32
    %c0_i32_0 = arith.constant 0 : i32
    %c0_i32_1 = arith.constant 0 : i32
    return %c0_i32, %c0_i32_0 : i32, i32
  }
  func.func @transform_4(%arg0: i32) -> (i32, i32) {
    %c0_i32 = arith.constant 0 : i32
    %c0_i32_0 = arith.constant 0 : i32
    %c0_i32_1 = arith.constant 0 : i32
    return %c0_i32, %c0_i32_0 : i32, i32
  }
  func.func @transform_5(%arg0: i32) -> (i32, i32) {
    %c0_i32 = arith.constant 0 : i32
    %c0_i32_0 = arith.constant 0 : i32
    %c0_i32_1 = arith.constant 0 : i32
    return %c0_i32, %c0_i32_0 : i32, i32
  }
  func.func @transform_6(%arg0: i32) -> (i32, i32) {
    %c0_i32 = arith.constant 0 : i32
    %c0_i32_0 = arith.constant 0 : i32
    %c0_i32_1 = arith.constant 0 : i32
    return %c0_i32, %c0_i32_0 : i32, i32
  }
  func.func @transform_7(%arg0: i32) -> (i32, i32) {
    %c0_i32 = arith.constant 0 : i32
    %c0_i32_0 = arith.constant 0 : i32
    %c0_i32_1 = arith.constant 0 : i32
    return %c0_i32, %c0_i32_0 : i32, i32
  }
  func.func @transform_8(%arg0: i32) -> (i32, i32) {
    %c0_i32 = arith.constant 0 : i32
    %c0_i32_0 = arith.constant 0 : i32
    %c0_i32_1 = arith.constant 0 : i32
    return %c0_i32, %c0_i32_0 : i32, i32
  }
  func.func @transform_9(%arg0: i32) -> (i32, i32) {
    %c0_i32 = arith.constant 0 : i32
    %c0_i32_0 = arith.constant 0 : i32
    return %arg0, %c0_i32 : i32, i32
  }
}

</mosaic_0001>

<llo_original>
// kernel: dqn_forward.1
$region0: #{dqn_forward.1}
  #allocation0 [shape = 'u32[]', space=smem, size = 0x4, offset = 0x4, fixed_abs, tag = 'smem constant byte address 0x4 - core index']
  #allocation1 [shape = 'u32[144,128]{1,0:T(1,128)}', space=vmem, size = 0x12000, scoped, tag = 'internal scratch']
  %s0 = inlined_call_operand.vmem [shape: bf16[16,32], index: 0, kind: input, shape index: {}]
  %s1 = inlined_call_operand.vmem [shape: bf16[32,128], index: 1, kind: input, shape index: {}]
  %s2 = inlined_call_operand.vmem [shape: f32[1,128], index: 2, kind: input, shape index: {}]
  %s3 = inlined_call_operand.vmem [shape: bf16[128,128], index: 3, kind: input, shape index: {}]
  %s4 = inlined_call_operand.vmem [shape: f32[1,128], index: 4, kind: input, shape index: {}]
  %s5 = inlined_call_operand.vmem [shape: bf16[128,64], index: 5, kind: input, shape index: {}]
  %s6 = inlined_call_operand.vmem [shape: f32[1,64], index: 6, kind: input, shape index: {}]
  %s7 = inlined_call_operand.vmem [shape: bf16[64,128], index: 7, kind: input, shape index: {}]
  %s8 = inlined_call_operand.vmem [shape: f32[1,128], index: 8, kind: input, shape index: {}]
  %s9 = inlined_call_operand.vmem [shape: f32[16,128], index: 9, kind: output, shape index: {}]
  %s10 = sld [smem:[#allocation0]]
  $region46: #{dqn_forward.1} parent=0
    _
  %s12 = ssub.s32 1, %s10
  %s13 = scalar_select 0, %s12, %s10
  // Predicated region
  $region2: #{dqn_forward.1} parent=0 // pred_check
    _
  $region3: #{dqn_forward.1} parent=0 // pred_check_branch
    %15 = sbr.rel (0) target = $region5
  $region4: #{dqn_forward.1} parent=0 // pred_region
    _
  $region5: #{dqn_forward.1} parent=0 // pred_fallthru
    _
  // Predicated region
  $region6: #{dqn_forward.1} parent=0 // pred_check
    _
  $region7: #{dqn_forward.1} parent=0 // pred_check_branch
    %17 = sbr.rel (0) target = $region9
  $region8: #{dqn_forward.1} parent=0 // pred_region
    _
  $region9: #{dqn_forward.1} parent=0 // pred_fallthru
    _
  // Predicated region
  $region10: #{dqn_forward.1} parent=0 // pred_check
    _
  $region11: #{dqn_forward.1} parent=0 // pred_check_branch
    %19 = sbr.rel (0) target = $region13
  $region12: #{dqn_forward.1} parent=0 // pred_region
    _
  $region13: #{dqn_forward.1} parent=0 // pred_fallthru
    _
  // Predicated region
  $region14: #{dqn_forward.1} parent=0 // pred_check
    _
  $region15: #{dqn_forward.1} parent=0 // pred_check_branch
    %21 = sbr.rel (0) target = $region17
  $region16: #{dqn_forward.1} parent=0 // pred_region
    _
  $region17: #{dqn_forward.1} parent=0 // pred_fallthru
    _
  // Predicated region
  $region18: #{dqn_forward.1} parent=0 // pred_check
    _
  $region19: #{dqn_forward.1} parent=0 // pred_check_branch
    %23 = sbr.rel (0) target = $region21
  $region20: #{dqn_forward.1} parent=0 // pred_region
    _
  $region21: #{dqn_forward.1} parent=0 // pred_fallthru
    _
  // Predicated region
  $region22: #{dqn_forward.1} parent=0 // pred_check
    _
  $region23: #{dqn_forward.1} parent=0 // pred_check_branch
    %25 = sbr.rel (0) target = $region25
  $region24: #{dqn_forward.1} parent=0 // pred_region
    _
  $region25: #{dqn_forward.1} parent=0 // pred_fallthru
    _
  // Predicated region
  $region26: #{dqn_forward.1} parent=0 // pred_check
    _
  $region27: #{dqn_forward.1} parent=0 // pred_check_branch
    %27 = sbr.rel (0) target = $region29
  $region28: #{dqn_forward.1} parent=0 // pred_region
    _
  $region29: #{dqn_forward.1} parent=0 // pred_fallthru
    _
  // Predicated region
  $region30: #{dqn_forward.1} parent=0 // pred_check
    _
  $region31: #{dqn_forward.1} parent=0 // pred_check_branch
    %29 = sbr.rel (0) target = $region33
  $region32: #{dqn_forward.1} parent=0 // pred_region
    _
  $region33: #{dqn_forward.1} parent=0 // pred_fallthru
    _
  // Predicated region
  $region34: #{dqn_forward.1} parent=0 // pred_check
    _
  $region35: #{dqn_forward.1} parent=0 // pred_check_branch
    %31 = sbr.rel (0) target = $region37
  $region36: #{dqn_forward.1} parent=0 // pred_region
    _
  $region37: #{dqn_forward.1} parent=0 // pred_fallthru
    _
  %v33 = vld [vmem:[%s0] sm:$0xf]
  %v34 = vld [vmem:[%s0 + $0x4] sm:$0xf]
  %v35 = vld [vmem:[%s1] sm:$0xf]
  %v36 = vld [vmem:[%s1 + $0x4] sm:$0xf]
  %v37 = vld [vmem:[%s1 + $0x8] sm:$0xf]
  %v38 = vld [vmem:[%s1 + $0xc] sm:$0xf]
  %v39 = vld [vmem:[%s2] sm:$0x1]
  %v41 = vlaneseq
  %v42 = vshrl.u32 %v41, 7
  %v43 = vsub.s32 0, %v42
  %v44 = vrot.slane %v39, %v43
  %v48 = vunpack.c.l.b16 %v33
  %v49 = vunpack.c.l.b16 %v34
  %v50 = vpack.c.b16 %v49, %v48
  %v55 = vunpack.c.l.b16 %v35
  %v56 = vunpack.c.l.b16 %v36
  %v57 = vunpack.c.l.b16 %v37
  %v58 = vunpack.c.l.b16 %v38
  %v59 = vpack.c.b16 %v56, %v55
  %v60 = vpack.c.b16 %v58, %v57
  %vm63 = vcmask 261120
  %v65 = vsel %vm63, %v50, 0
  %67 = vmatprep.subr.bf16.mxu0 0
  %68 = vmatpush1.bf16.msra.mxu0 0
  %69 = vmatprep.subr.bf16.mxu0 0
  %70 = vmatpush1.bf16.msra.mxu0 0
  %71 = vmatprep.subr.bf16.mxu0 0
  %72 = vmatpush1.bf16.msra.mxu0 0
  %73 = vmatprep.subr.bf16.mxu0 0
  %74 = vmatpush1.bf16.msra.mxu0 0
  %75 = vmatprep.subr.bf16.mxu0 0
  %76 = vmatpush1.bf16.msra.mxu0 0
  %77 = vmatprep.subr.bf16.mxu0 0
  %78 = vmatpush1.bf16.msra.mxu0 0
  %79 = vmatprep.subr.bf16.mxu0 0
  %80 = vmatpush1.bf16.msra.mxu0 %v60
  %81 = vmatprep.subr.bf16.mxu0 0
  %82 = vmatpush1.bf16.msra.mxu0 %v59
  %83 = vmatprep.subr.bf16.mxu0 0
  %84 = vmatpush2.bf16.msra.mxu0 0
  %85 = vmatprep.subr.bf16.mxu0 0
  %86 = vmatpush2.bf16.msra.mxu0 0
  %87 = vmatprep.subr.bf16.mxu0 0
  %88 = vmatpush2.bf16.msra.mxu0 0
  %89 = vmatprep.subr.bf16.mxu0 0
  %90 = vmatpush2.bf16.msra.mxu0 0
  %91 = vmatprep.subr.bf16.mxu0 0
  %92 = vmatpush2.bf16.msra.mxu0 0
  %93 = vmatprep.subr.bf16.mxu0 0
  %94 = vmatpush2.bf16.msra.mxu0 0
  %95 = vmatprep.subr.bf16.mxu0 0
  %96 = vmatpush2.bf16.msra.mxu0 0
  %97 = vmatprep.subr.bf16.mxu0 0
  %98 = vmatpush2.bf16.msra.mxu0 0
  %99 = vmatprep.mubr.bf16.mxu0 0
  %100 = vmatmul.mubr.bf16.gmra.mxu0 %v65
  %v101 = vpop.f32.mrf.mxu0
  %v102 = vadd.f32 %v44, %v101
  %v103 = vpop.f32.mrf.mxu0
  %v104 = vpop.f32.mrf.mxu0
  %v105 = vadd.f32 %v44, %v104
  %v106 = vpop.f32.mrf.mxu0
  %107 = vdwg.mxu0
  %vm108 = vcmp.gt.f32.partialorder %v102, 0.0
  %vm109 = vcmp.gt.f32.partialorder %v105, 0.0
  %v110 = vmul.f32 %v102, 0.01
  %v111 = vmul.f32 %v105, 0.01
  %v112 = vsel %vm108, %v102, %v110
  %v113 = vsel %vm109, %v105, %v111
  %v114 = vpack.c.bf16 %v113, %v112
  %v115 = vld [vmem:[%s3] sm:$0xf]
  %v116 = vld [vmem:[%s3 + $0x4] sm:$0xf]
  %v117 = vld [vmem:[%s3 + $0x8] sm:$0xf]
  %v118 = vld [vmem:[%s3 + $0xc] sm:$0xf]
  %v119 = vld [vmem:[%s3 + $0x10] sm:$0xf]
  %v120 = vld [vmem:[%s3 + $0x14] sm:$0xf]
  %v121 = vld [vmem:[%s3 + $0x18] sm:$0xf]
  %v122 = vld [vmem:[%s3 + $0x1c] sm:$0xf]
  %v123 = vld [vmem:[%s3 + $0x20] sm:$0xf]
  %v124 = vld [vmem:[%s3 + $0x24] sm:$0xf]
  %v125 = vld [vmem:[%s3 + $0x28] sm:$0xf]
  %v126 = vld [vmem:[%s3 + $0x2c] sm:$0xf]
  %v127 = vld [vmem:[%s3 + $0x30] sm:$0xf]
  %v128 = vld [vmem:[%s3 + $0x34] sm:$0xf]
  %v129 = vld [vmem:[%s3 + $0x38] sm:$0xf]
  %v130 = vld [vmem:[%s3 + $0x3c] sm:$0xf]
  %v131 = vld [vmem:[%s4] sm:$0x1]
  %v133 = vlaneseq
  %v134 = vshrl.u32 %v133, 7
  %v135 = vsub.s32 0, %v134
  %v136 = vrot.slane %v131, %v135
  %v154 = vunpack.c.l.b16 %v115
  %v155 = vunpack.c.l.b16 %v116
  %v156 = vunpack.c.l.b16 %v117
  %v157 = vunpack.c.l.b16 %v118
  %v158 = vunpack.c.l.b16 %v119
  %v159 = vunpack.c.l.b16 %v120
  %v160 = vunpack.c.l.b16 %v121
  %v161 = vunpack.c.l.b16 %v122
  %v162 = vunpack.c.l.b16 %v123
  %v163 = vunpack.c.l.b16 %v124
  %v164 = vunpack.c.l.b16 %v125
  %v165 = vunpack.c.l.b16 %v126
  %v166 = vunpack.c.l.b16 %v127
  %v167 = vunpack.c.l.b16 %v128
  %v168 = vunpack.c.l.b16 %v129
  %v169 = vunpack.c.l.b16 %v130
  %v170 = vpack.c.b16 %v155, %v154
  %v171 = vpack.c.b16 %v157, %v156
  %v172 = vpack.c.b16 %v159, %v158
  %v173 = vpack.c.b16 %v161, %v160
  %v174 = vpack.c.b16 %v163, %v162
  %v175 = vpack.c.b16 %v165, %v164
  %v176 = vpack.c.b16 %v167, %v166
  %v177 = vpack.c.b16 %v169, %v168
  %186 = vmatprep.subr.bf16.mxu0 0
  %187 = vmatpush1.bf16.msra.mxu0 %v177
  %188 = vmatprep.subr.bf16.mxu0 0
  %189 = vmatpush1.bf16.msra.mxu0 %v176
  %190 = vmatprep.subr.bf16.mxu0 0
  %191 = vmatpush1.bf16.msra.mxu0 %v175
  %192 = vmatprep.subr.bf16.mxu0 0
  %193 = vmatpush1.bf16.msra.mxu0 %v174
  %194 = vmatprep.subr.bf16.mxu0 0
  %195 = vmatpush1.bf16.msra.mxu0 %v173
  %196 = vmatprep.subr.bf16.mxu0 0
  %197 = vmatpush1.bf16.msra.mxu0 %v172
  %198 = vmatprep.subr.bf16.mxu0 0
  %199 = vmatpush1.bf16.msra.mxu0 %v171
  %200 = vmatprep.subr.bf16.mxu0 0
  %201 = vmatpush1.bf16.msra.mxu0 %v170
  %202 = vmatprep.subr.bf16.mxu0 0
  %203 = vmatpush2.bf16.msra.mxu0 0
  %204 = vmatprep.subr.bf16.mxu0 0
  %205 = vmatpush2.bf16.msra.mxu0 0
  %206 = vmatprep.subr.bf16.mxu0 0
  %207 = vmatpush2.bf16.msra.mxu0 0
  %208 = vmatprep.subr.bf16.mxu0 0
  %209 = vmatpush2.bf16.msra.mxu0 0
  %210 = vmatprep.subr.bf16.mxu0 0
  %211 = vmatpush2.bf16.msra.mxu0 0
  %212 = vmatprep.subr.bf16.mxu0 0
  %213 = vmatpush2.bf16.msra.mxu0 0
  %214 = vmatprep.subr.bf16.mxu0 0
  %215 = vmatpush2.bf16.msra.mxu0 0
  %216 = vmatprep.subr.bf16.mxu0 0
  %217 = vmatpush2.bf16.msra.mxu0 0
  %218 = vmatprep.mubr.bf16.mxu0 0
  %219 = vmatmul.mubr.bf16.gmra.mxu0 %v114
  %v220 = vpop.f32.mrf.mxu0
  %v221 = vadd.f32 %v136, %v220
  %v222 = vpop.f32.mrf.mxu0
  %v223 = vpop.f32.mrf.mxu0
  %v224 = vadd.f32 %v136, %v223
  %v225 = vpop.f32.mrf.mxu0
  %226 = vdwg.mxu0
  %vm227 = vcmp.gt.f32.partialorder %v221, 0.0
  %vm228 = vcmp.gt.f32.partialorder %v224, 0.0
  %v229 = vmul.f32 %v221, 0.01
  %v230 = vmul.f32 %v224, 0.01
  %v231 = vsel %vm227, %v221, %v229
  %v232 = vsel %vm228, %v224, %v230
  %v233 = vpack.c.bf16 %v232, %v231
  %v234 = vld [vmem:[%s5] sm:$0xf]
  %v235 = vld [vmem:[%s5 + $0x4] sm:$0xf]
  %v236 = vld [vmem:[%s5 + $0x8] sm:$0xf]
  %v237 = vld [vmem:[%s5 + $0xc] sm:$0xf]
  %v238 = vld [vmem:[%s5 + $0x10] sm:$0xf]
  %v239 = vld [vmem:[%s5 + $0x14] sm:$0xf]
  %v240 = vld [vmem:[%s5 + $0x18] sm:$0xf]
  %v241 = vld [vmem:[%s5 + $0x1c] sm:$0xf]
  %v242 = vld [vmem:[%s5 + $0x20] sm:$0xf]
  %v243 = vld [vmem:[%s5 + $0x24] sm:$0xf]
  %v244 = vld [vmem:[%s5 + $0x28] sm:$0xf]
  %v245 = vld [vmem:[%s5 + $0x2c] sm:$0xf]
  %v246 = vld [vmem:[%s5 + $0x30] sm:$0xf]
  %v247 = vld [vmem:[%s5 + $0x34] sm:$0xf]
  %v248 = vld [vmem:[%s5 + $0x38] sm:$0xf]
  %v249 = vld [vmem:[%s5 + $0x3c] sm:$0xf]
  %v250 = vld [vmem:[%s6] sm:$0x1]
  %v252 = vlaneseq
  %v253 = vshrl.u32 %v252, 7
  %v254 = vsub.s32 0, %v253
  %v255 = vrot.slane %v250, %v254
  %v273 = vunpack.c.l.b16 %v234
  %v274 = vunpack.c.l.b16 %v235
  %v275 = vunpack.c.l.b16 %v236
  %v276 = vunpack.c.l.b16 %v237
  %v277 = vunpack.c.l.b16 %v238
  %v278 = vunpack.c.l.b16 %v239
  %v279 = vunpack.c.l.b16 %v240
  %v280 = vunpack.c.l.b16 %v241
  %v281 = vunpack.c.l.b16 %v242
  %v282 = vunpack.c.l.b16 %v243
  %v283 = vunpack.c.l.b16 %v244
  %v284 = vunpack.c.l.b16 %v245
  %v285 = vunpack.c.l.b16 %v246
  %v286 = vunpack.c.l.b16 %v247
  %v287 = vunpack.c.l.b16 %v248
  %v288 = vunpack.c.l.b16 %v249
  %v289 = vpack.c.b16 %v274, %v273
  %v290 = vpack.c.b16 %v276, %v275
  %v291 = vpack.c.b16 %v278, %v277
  %v292 = vpack.c.b16 %v280, %v279
  %v293 = vpack.c.b16 %v282, %v281
  %v294 = vpack.c.b16 %v284, %v283
  %v295 = vpack.c.b16 %v286, %v285
  %v296 = vpack.c.b16 %v288, %v287
  %305 = vmatprep.subr.bf16.mxu0 0
  %306 = vmatpush1.bf16.msra.mxu0 %v296
  %307 = vmatprep.subr.bf16.mxu0 0
  %308 = vmatpush1.bf16.msra.mxu0 %v295
  %309 = vmatprep.subr.bf16.mxu0 0
  %310 = vmatpush1.bf16.msra.mxu0 %v294
  %311 = vmatprep.subr.bf16.mxu0 0
  %312 = vmatpush1.bf16.msra.mxu0 %v293
  %313 = vmatprep.subr.bf16.mxu0 0
  %314 = vmatpush1.bf16.msra.mxu0 %v292
  %315 = vmatprep.subr.bf16.mxu0 0
  %316 = vmatpush1.bf16.msra.mxu0 %v291
  %317 = vmatprep.subr.bf16.mxu0 0
  %318 = vmatpush1.bf16.msra.mxu0 %v290
  %319 = vmatprep.subr.bf16.mxu0 0
  %320 = vmatpush1.bf16.msra.mxu0 %v289
  %321 = vmatprep.subr.bf16.mxu0 0
  %322 = vmatpush2.bf16.msra.mxu0 0
  %323 = vmatprep.subr.bf16.mxu0 0
  %324 = vmatpush2.bf16.msra.mxu0 0
  %325 = vmatprep.subr.bf16.mxu0 0
  %326 = vmatpush2.bf16.msra.mxu0 0
  %327 = vmatprep.subr.bf16.mxu0 0
  %328 = vmatpush2.bf16.msra.mxu0 0
  %329 = vmatprep.subr.bf16.mxu0 0
  %330 = vmatpush2.bf16.msra.mxu0 0
  %331 = vmatprep.subr.bf16.mxu0 0
  %332 = vmatpush2.bf16.msra.mxu0 0
  %333 = vmatprep.subr.bf16.mxu0 0
  %334 = vmatpush2.bf16.msra.mxu0 0
  %335 = vmatprep.subr.bf16.mxu0 0
  %336 = vmatpush2.bf16.msra.mxu0 0
  %337 = vmatprep.mubr.bf16.mxu0 0
  %338 = vmatmul.mubr.bf16.gmra.mxu0 %v233
  %v339 = vpop.f32.mrf.mxu0
  %v340 = vadd.f32 %v255, %v339
  %v341 = vpop.f32.mrf.mxu0
  %v342 = vpop.f32.mrf.mxu0
  %v343 = vadd.f32 %v255, %v342
  %v344 = vpop.f32.mrf.mxu0
  %345 = vdwg.mxu0
  %vm346 = vcmp.gt.f32.partialorder %v340, 0.0
  %vm347 = vcmp.gt.f32.partialorder %v343, 0.0
  %v348 = vmul.f32 %v340, 0.01
  %v349 = vmul.f32 %v343, 0.01
  %v350 = vsel %vm346, %v340, %v348
  %v351 = vsel %vm347, %v343, %v349
  %v352 = vpack.c.bf16 %v351, %v350
  %v353 = vld [vmem:[%s7] sm:$0xf]
  %v354 = vld [vmem:[%s7 + $0x4] sm:$0xf]
  %v355 = vld [vmem:[%s7 + $0x8] sm:$0xf]
  %v356 = vld [vmem:[%s7 + $0xc] sm:$0xf]
  %v357 = vld [vmem:[%s7 + $0x10] sm:$0xf]
  %v358 = vld [vmem:[%s7 + $0x14] sm:$0xf]
  %v359 = vld [vmem:[%s7 + $0x18] sm:$0xf]
  %v360 = vld [vmem:[%s7 + $0x1c] sm:$0xf]
  %v361 = vld [vmem:[%s8] sm:$0x1]
  %v363 = vlaneseq
  %v364 = vshrl.u32 %v363, 7
  %v365 = vsub.s32 0, %v364
  %v366 = vrot.slane %v361, %v365
  %v376 = vunpack.c.l.b16 %v353
  %v377 = vunpack.c.l.b16 %v354
  %v378 = vunpack.c.l.b16 %v355
  %v379 = vunpack.c.l.b16 %v356
  %v380 = vunpack.c.l.b16 %v357
  %v381 = vunpack.c.l.b16 %v358
  %v382 = vunpack.c.l.b16 %v359
  %v383 = vunpack.c.l.b16 %v360
  %v384 = vpack.c.b16 %v377, %v376
  %v385 = vpack.c.b16 %v379, %v378
  %v386 = vpack.c.b16 %v381, %v380
  %v387 = vpack.c.b16 %v383, %v382
  %vm392 = vcmask 523264
  %v394 = vsel %vm392, %v352, 0
  %396 = vmatprep.subr.bf16.mxu0 0
  %397 = vmatpush1.bf16.msra.mxu0 0
  %398 = vmatprep.subr.bf16.mxu0 0
  %399 = vmatpush1.bf16.msra.mxu0 0
  %400 = vmatprep.subr.bf16.mxu0 0
  %401 = vmatpush1.bf16.msra.mxu0 0
  %402 = vmatprep.subr.bf16.mxu0 0
  %403 = vmatpush1.bf16.msra.mxu0 0
  %404 = vmatprep.subr.bf16.mxu0 0
  %405 = vmatpush1.bf16.msra.mxu0 %v387
  %406 = vmatprep.subr.bf16.mxu0 0
  %407 = vmatpush1.bf16.msra.mxu0 %v386
  %408 = vmatprep.subr.bf16.mxu0 0
  %409 = vmatpush1.bf16.msra.mxu0 %v385
  %410 = vmatprep.subr.bf16.mxu0 0
  %411 = vmatpush1.bf16.msra.mxu0 %v384
  %412 = vmatprep.subr.bf16.mxu0 0
  %413 = vmatpush2.bf16.msra.mxu0 0
  %414 = vmatprep.subr.bf16.mxu0 0
  %415 = vmatpush2.bf16.msra.mxu0 0
  %416 = vmatprep.subr.bf16.mxu0 0
  %417 = vmatpush2.bf16.msra.mxu0 0
  %418 = vmatprep.subr.bf16.mxu0 0
  %419 = vmatpush2.bf16.msra.mxu0 0
  %420 = vmatprep.subr.bf16.mxu0 0
  %421 = vmatpush2.bf16.msra.mxu0 0
  %422 = vmatprep.subr.bf16.mxu0 0
  %423 = vmatpush2.bf16.msra.mxu0 0
  %424 = vmatprep.subr.bf16.mxu0 0
  %425 = vmatpush2.bf16.msra.mxu0 0
  %426 = vmatprep.subr.bf16.mxu0 0
  %427 = vmatpush2.bf16.msra.mxu0 0
  %428 = vmatprep.mubr.bf16.mxu0 0
  %429 = vmatmul.mubr.bf16.gmra.mxu0 %v394
  %v430 = vpop.f32.mrf.mxu0
  %v431 = vadd.f32 %v366, %v430
  %v432 = vpop.f32.mrf.mxu0
  %v433 = vpop.f32.mrf.mxu0
  %v434 = vadd.f32 %v366, %v433
  %v435 = vpop.f32.mrf.mxu0
  %436 = vdwg.mxu0
  %437 = vmax.xlane.f32.xlu0 %v431
  %v438 = vpop.xlane.xlu0 %437
  %439 = vmax.xlane.f32.xlu0 %v434
  %v440 = vpop.xlane.xlu0 %439
  %v441 = vsub.f32 %v431, %v438
  %v442 = vsub.f32 %v434, %v440
  %v443 = vmul.f32 %v441, 1.442695
  %v444 = vpow.pop %v443
  %v445 = vmul.f32 %v442, 1.442695
  %v446 = vpow.pop %v445
  %447 = vadd.xlane.f32.xlu0 %v444
  %v448 = vpop.xlane.xlu0 %447
  %449 = vadd.xlane.f32.xlu0 %v446
  %v450 = vpop.xlane.xlu0 %449
  %v451 = vrcp.pop %v448
  %v452 = vrcp.pop %v450
  %v453 = vmul.f32 %v444, %v451
  %v454 = vmul.f32 %v446, %v452
  %455 = vst [vmem:[%s9] sm:$0xff] %v453
  %456 = vst [vmem:[%s9 + $0x8] sm:$0xff] %v454
  // Predicated region
  $region38: #{dqn_forward.1} parent=0 // pred_check
    _
  $region39: #{dqn_forward.1} parent=0 // pred_check_branch
    %458 = sbr.rel (0) target = $region41
  $region40: #{dqn_forward.1} parent=0 // pred_region
    _
  $region41: #{dqn_forward.1} parent=0 // pred_fallthru
    _
  // Predicated region
  $region42: #{dqn_forward.1} parent=0 // pred_check
    _
  $region43: #{dqn_forward.1} parent=0 // pred_check_branch
    %460 = sbr.rel (0) target = $region45
  $region44: #{dqn_forward.1} parent=0 // pred_region
    _
  $region45: #{dqn_forward.1} parent=0 // pred_fallthru
    _

</llo_original>
